<compile_context>
chip_gen: v5e
topology: v5e:2x2
jax: 0.10.0
libtpu: 0.0.40
codegen_flags: <defaults>
</compile_context>

<pallas_src>
import functools

import numpy as np
import jax
import jax.numpy as jnp
from jax.experimental import pallas as pl
from jax.experimental.pallas import tpu as pltpu

NEG_SLOPE = 0.01        # nn.LeakyReLU default
BN_EPS = 1e-5

VMEM_SPEC = pl.BlockSpec(memory_space=pltpu.MemorySpace.VMEM)


# ------------------------------ Pallas kernel --------------------------------
def _resup_block_kernel(x_ref, mask_ref, wfull_ref, bfull_ref, g0_ref, be0_ref,
                        o_ref, stk_ref, *, w, sz):
    """Fused resup_block forward.

    x_ref    : [N, C_in, H*W]              input, channel slabs lane-dense per batch
    mask_ref : [sz*sz, H*W]                per-tap zero-padding masks (precomputed)
    wfull    : [C_out, (sz*sz+1)*C_in]     conv0 taps (tap-major) ++ folded 1x1 proj weight
    bfull    : [C_out, 1]                  b0 + (bp + wp @ bep)
    g0/be0   : [C_in, 1]                   BN affine of the conv0 branch
    o_ref    : [N, C_out, H*W]             output
    stk_ref  : [(sz*sz+1)*C_in, H*W]       VMEM scratch: stacked im2col + proj block
    """
    n, c_in, hw = x_ref.shape
    p = sz // 2
    inv_m = 1.0 / (n * hw)

    # ---- BatchNorm2d statistics over (N, H, W); both branches see the same input ----
    # (running-stat tracking is a training side effect and does not affect the output)
    xsum = jnp.zeros((c_in, 1), jnp.float32)
    for b in range(n):
        xsum = xsum + jnp.sum(x_ref[b], axis=1, keepdims=True)
    mean = xsum * inv_m
    vsum = jnp.zeros((c_in, 1), jnp.float32)
    for b in range(n):
        d = x_ref[b] - mean
        vsum = vsum + jnp.sum(d * d, axis=1, keepdims=True)
    inv_std = jax.lax.rsqrt(vsum * inv_m + BN_EPS)          # EUP rsqrt (free slot)

    # fold normalization (+ conv-branch affine) into per-channel scale / offset
    s_n = inv_std
    o_n = -mean * inv_std                                    # xn  = x * s_n + o_n
    s_0 = g0_ref[...] * s_n
    o_0 = be0_ref[...] + g0_ref[...] * o_n                   # bn0 = x * s_0 + o_0

    wfull = wfull_ref[...]
    bfull = bfull_ref[...]

    for b in range(n):                                       # N is tiny -> unrolled
        xb = x_ref[b]                                        # [C_in, HW]
        a = xb * s_0 + o_0
        a = jnp.maximum(a, NEG_SLOPE * a)                    # LeakyReLU(0.01)

        # im2col: sz*sz lane-rolled + boundary-masked taps stacked into VMEM scratch.
        # roll wrap-around lanes are exactly the lanes the mask zeroes.
        t = 0
        for dy in range(-p, p + 1):
            for dx in range(-p, p + 1):
                k = dy * w + dx
                if k == 0:
                    blk = a                                  # centre tap: mask is all ones
                else:
                    blk = pltpu.roll(a, (-k) % hw, axis=1) * mask_ref[pl.ds(t, 1), :]
                stk_ref[pl.ds(t * c_in, c_in), :] = blk
                t += 1
        # proj-branch block: normalized input (its BN affine is folded into wfull/bfull)
        stk_ref[pl.ds(t * c_in, c_in), :] = xb * s_n + o_n

        # both branches + residual add + biases as ONE MXU dot per batch element
        o_ref[b] = jnp.dot(wfull, stk_ref[...],
                           preferred_element_type=jnp.float32) + bfull


# ------------------------------- JAX wrapper ----------------------------------
def resup_block_forward(x, style, kparams):
    """x: [N, C_in, H, W] (NCHW), style: unused by resup_block.forward."""
    del style  # the reference forward ignores `style`
    n, c_in, h, w = x.shape
    hw = h * w
    wfull = kparams['wfull']
    c_out = wfull.shape[0]
    taps = wfull.shape[1] // c_in - 1
    sz = int(round(taps ** 0.5))
    assert sz * sz == taps and sz % 2 == 1  # TODO(synk): even sz changes the output spatial size
    p = sz // 2

    # per-tap zero-padding masks: trace-time numpy constant -> zero per-call XLA ops
    yy, xx = np.meshgrid(np.arange(h), np.arange(w), indexing="ij")
    rows = []
    for dy in range(-p, p + 1):
        for dx in range(-p, p + 1):
            rows.append(((yy + dy >= 0) & (yy + dy < h) &
                         (xx + dx >= 0) & (xx + dx < w)).reshape(-1))
    mask = jnp.asarray(np.stack(rows), jnp.float32)          # [sz*sz, H*W]

    x3 = x.astype(jnp.float32).reshape(n, c_in, hw)          # free reshape, no transpose

    kernel = functools.partial(_resup_block_kernel, w=w, sz=sz)
    out = pl.pallas_call(
        kernel,
        out_shape=jax.ShapeDtypeStruct((n, c_out, hw), jnp.float32),
        in_specs=[VMEM_SPEC] * 6,
        out_specs=VMEM_SPEC,
        scratch_shapes=[pltpu.VMEM(((sz * sz + 1) * c_in, hw), jnp.float32)],
        compiler_params=pltpu.CompilerParams(vmem_limit_bytes=32 * 1024 * 1024),
    )(x3, mask, wfull, kparams['bfull'], kparams['g0'], kparams['be0'])

    return out.reshape(n, c_out, h, w)                       # free reshape back to NCHW


resup_block_forward_jit = jax.jit(resup_block_forward)


# --------------------------- parameter construction ---------------------------
def spectral_normalize(weight, iters=50):
    """Divide weight by its largest singular value (converged power iteration).

    # TODO(synk): torch.nn.utils.parametrizations.spectral_norm does 1 power iteration
    # per forward with persistent randomly-initialized u/v; we use the converged sigma,
    # the deterministic fixed point of that procedure, applied once at init.
    """
    mat = weight.reshape(weight.shape[0], -1).astype(jnp.float32)
    v = jnp.ones((mat.shape[1],), jnp.float32)
    v = v / jnp.linalg.norm(v)
    u = mat @ v
    for _ in range(iters):
        u = mat @ v
        u = u / (jnp.linalg.norm(u) + 1e-12)
        v = mat.T @ u
        v = v / (jnp.linalg.norm(v) + 1e-12)
    sigma = u @ (mat @ v)
    return weight / sigma


def init_params(key, c_in, c_out, sz):
    k0, k1, k2, k3 = jax.random.split(key, 4)
    w0 = jax.random.normal(k0, (c_out, c_in, sz, sz), jnp.float32) * 0.1
    b0 = jax.random.normal(k1, (c_out,), jnp.float32) * 0.1
    wp = jax.random.normal(k2, (c_out, c_in, 1, 1), jnp.float32) * 0.1
    bp = jax.random.normal(k3, (c_out,), jnp.float32) * 0.1
    return dict(
        w0=spectral_normalize(w0), b0=b0,
        wp=spectral_normalize(wp), bp=bp,
        # BatchNorm2d(in_channels) affine params (default init), one BN per branch
        g0=jnp.ones((c_in,), jnp.float32), be0=jnp.zeros((c_in,), jnp.float32),
        gp=jnp.ones((c_in,), jnp.float32), bep=jnp.zeros((c_in,), jnp.float32),
    )


def fold_params(params):
    """One-time static weight plumbing (hoisted out of the per-call hot path)."""
    w0, b0 = params['w0'], params['b0']
    wp, bp = params['wp'], params['bp']
    c_out, c_in, sz, _ = w0.shape
    # conv0 weight in tap-major stacked layout: column t*C_in + c <-> w0[:, c, ky, kx], t = ky*sz + kx
    w0s = jnp.transpose(w0, (0, 2, 3, 1)).reshape(c_out, sz * sz * c_in)
    wp_m = wp.reshape(c_out, c_in)
    # fold the proj branch's BN affine into its 1x1 conv
    wp_eff = wp_m * params['gp'][None, :]
    bp_eff = bp + wp_m @ params['bep']
    return dict(
        wfull=jnp.concatenate([w0s, wp_eff], axis=1),         # [C_out, (sz*sz+1)*C_in]
        bfull=(b0 + bp_eff)[:, None],                         # [C_out, 1]
        g0=params['g0'][:, None], be0=params['be0'][:, None], # [C_in, 1]
    )


# ----------------------------------- main --------------------------------------
if __name__ == "__main__":
    N, C_IN, C_OUT, SPATIAL, STYLE_CH, SZ = 2, 4, 8, 16, 8, 3

    key = jax.random.PRNGKey(0)
    k_x, k_s, k_p = jax.random.split(key, 3)
    x = jax.random.normal(k_x, (N, C_IN, SPATIAL, SPATIAL), jnp.float32)
    style = jax.random.normal(k_s, (N, STYLE_CH), jnp.float32)
    params = init_params(k_p, C_IN, C_OUT, SZ)
    kparams = fold_params(params)

    out = resup_block_forward_jit(x, style, kparams)
    jax.block_until_ready(out)

    assert out.shape == (N, C_OUT, SPATIAL, SPATIAL)
    assert bool(jnp.all(jnp.isfinite(out)))
    print("KERNEL_OK")
</pallas_src>

<mosaic_0001>
module attributes {stable_mosaic.version = 11 : i64} {
  func.func @_resup_block_kernel(%arg0: memref<2x4x256xf32, #tpu.memory_space<vmem>>, %arg1: memref<9x256xf32, #tpu.memory_space<vmem>>, %arg2: memref<8x40xf32, #tpu.memory_space<vmem>>, %arg3: memref<8x1xf32, #tpu.memory_space<vmem>>, %arg4: memref<4x1xf32, #tpu.memory_space<vmem>>, %arg5: memref<4x1xf32, #tpu.memory_space<vmem>>, %arg6: memref<2x8x256xf32, #tpu.memory_space<vmem>>, %arg7: memref<40x256xf32, #tpu.memory_space<vmem>>) attributes {dimension_semantics = [], scalar_prefetch = 0 : i64, scratch_operands = 1 : i64, tpu.core_type = #tpu.core_type<tc>} {
    %cst = arith.constant 0.000000e+00 : f32
    %0 = vector.broadcast %cst : f32 to vector<4x1xf32>
    %c0 = arith.constant 0 : index
    %c0_0 = arith.constant 0 : index
    %c0_1 = arith.constant 0 : index
    %1 = vector.load %arg0[%c0, %c0_0, %c0_1] : memref<2x4x256xf32, #tpu.memory_space<vmem>>, vector<1x4x256xf32>
    %2 = vector.shape_cast %1 : vector<1x4x256xf32> to vector<4x256xf32>
    %cst_2 = arith.constant dense<0.000000e+00> : vector<4xf32>
    %3 = vector.multi_reduction <add>, %2, %cst_2 [1] : vector<4x256xf32> to vector<4xf32>
    %4 = vector.shape_cast %3 : vector<4xf32> to vector<4x1xf32>
    %5 = arith.addf %0, %4 : vector<4x1xf32>
    %c1 = arith.constant 1 : index
    %c0_3 = arith.constant 0 : index
    %c0_4 = arith.constant 0 : index
    %6 = vector.load %arg0[%c1, %c0_3, %c0_4] : memref<2x4x256xf32, #tpu.memory_space<vmem>>, vector<1x4x256xf32>
    %7 = vector.shape_cast %6 : vector<1x4x256xf32> to vector<4x256xf32>
    %cst_5 = arith.constant dense<0.000000e+00> : vector<4xf32>
    %8 = vector.multi_reduction <add>, %7, %cst_5 [1] : vector<4x256xf32> to vector<4xf32>
    %9 = vector.shape_cast %8 : vector<4xf32> to vector<4x1xf32>
    %10 = arith.addf %5, %9 : vector<4x1xf32>
    %cst_6 = arith.constant 0.001953125 : f32
    %11 = vector.broadcast %cst_6 : f32 to vector<4x1xf32>
    %12 = arith.mulf %10, %11 : vector<4x1xf32>
    %cst_7 = arith.constant 0.000000e+00 : f32
    %13 = vector.broadcast %cst_7 : f32 to vector<4x1xf32>
    %c0_8 = arith.constant 0 : index
    %c0_9 = arith.constant 0 : index
    %c0_10 = arith.constant 0 : index
    %14 = vector.load %arg0[%c0_8, %c0_9, %c0_10] : memref<2x4x256xf32, #tpu.memory_space<vmem>>, vector<1x4x256xf32>
    %15 = vector.shape_cast %14 : vector<1x4x256xf32> to vector<4x256xf32>
    %16 = vector.broadcast %12 : vector<4x1xf32> to vector<4x256xf32>
    %17 = arith.subf %15, %16 : vector<4x256xf32>
    %18 = arith.mulf %17, %17 : vector<4x256xf32>
    %cst_11 = arith.constant dense<0.000000e+00> : vector<4xf32>
    %19 = vector.multi_reduction <add>, %18, %cst_11 [1] : vector<4x256xf32> to vector<4xf32>
    %20 = vector.shape_cast %19 : vector<4xf32> to vector<4x1xf32>
    %21 = arith.addf %13, %20 : vector<4x1xf32>
    %c1_12 = arith.constant 1 : index
    %c0_13 = arith.constant 0 : index
    %c0_14 = arith.constant 0 : index
    %22 = vector.load %arg0[%c1_12, %c0_13, %c0_14] : memref<2x4x256xf32, #tpu.memory_space<vmem>>, vector<1x4x256xf32>
    %23 = vector.shape_cast %22 : vector<1x4x256xf32> to vector<4x256xf32>
    %24 = vector.broadcast %12 : vector<4x1xf32> to vector<4x256xf32>
    %25 = arith.subf %23, %24 : vector<4x256xf32>
    %26 = arith.mulf %25, %25 : vector<4x256xf32>
    %cst_15 = arith.constant dense<0.000000e+00> : vector<4xf32>
    %27 = vector.multi_reduction <add>, %26, %cst_15 [1] : vector<4x256xf32> to vector<4xf32>
    %28 = vector.shape_cast %27 : vector<4xf32> to vector<4x1xf32>
    %29 = arith.addf %21, %28 : vector<4x1xf32>
    %cst_16 = arith.constant 0.001953125 : f32
    %30 = vector.broadcast %cst_16 : f32 to vector<4x1xf32>
    %31 = arith.mulf %29, %30 : vector<4x1xf32>
    %cst_17 = arith.constant 9.99999974E-6 : f32
    %32 = vector.broadcast %cst_17 : f32 to vector<4x1xf32>
    %33 = arith.addf %31, %32 : vector<4x1xf32>
    %34 = math.rsqrt %33 : vector<4x1xf32>
    %cst_18 = arith.constant 0.000000e+00 : f32
    %35 = vector.broadcast %cst_18 : f32 to vector<4x1xf32>
    %36 = arith.subf %35, %12 : vector<4x1xf32>
    %37 = arith.mulf %36, %34 : vector<4x1xf32>
    %c0_19 = arith.constant 0 : index
    %c0_20 = arith.constant 0 : index
    %38 = vector.load %arg4[%c0_19, %c0_20] : memref<4x1xf32, #tpu.memory_space<vmem>>, vector<4x1xf32>
    %39 = arith.mulf %38, %34 : vector<4x1xf32>
    %c0_21 = arith.constant 0 : index
    %c0_22 = arith.constant 0 : index
    %40 = vector.load %arg5[%c0_21, %c0_22] : memref<4x1xf32, #tpu.memory_space<vmem>>, vector<4x1xf32>
    %c0_23 = arith.constant 0 : index
    %c0_24 = arith.constant 0 : index
    %41 = vector.load %arg4[%c0_23, %c0_24] : memref<4x1xf32, #tpu.memory_space<vmem>>, vector<4x1xf32>
    %42 = arith.mulf %41, %37 : vector<4x1xf32>
    %43 = arith.addf %40, %42 : vector<4x1xf32>
    %c0_25 = arith.constant 0 : index
    %c0_26 = arith.constant 0 : index
    %44 = vector.load %arg2[%c0_25, %c0_26] : memref<8x40xf32, #tpu.memory_space<vmem>>, vector<8x40xf32>
    %c0_27 = arith.constant 0 : index
    %c0_28 = arith.constant 0 : index
    %45 = vector.load %arg3[%c0_27, %c0_28] : memref<8x1xf32, #tpu.memory_space<vmem>>, vector<8x1xf32>
    %c0_29 = arith.constant 0 : index
    %c0_30 = arith.constant 0 : index
    %c0_31 = arith.constant 0 : index
    %46 = vector.load %arg0[%c0_29, %c0_30, %c0_31] : memref<2x4x256xf32, #tpu.memory_space<vmem>>, vector<1x4x256xf32>
    %47 = vector.shape_cast %46 : vector<1x4x256xf32> to vector<4x256xf32>
    %48 = vector.broadcast %39 : vector<4x1xf32> to vector<4x256xf32>
    %49 = arith.mulf %47, %48 : vector<4x256xf32>
    %50 = vector.broadcast %43 : vector<4x1xf32> to vector<4x256xf32>
    %51 = arith.addf %49, %50 : vector<4x256xf32>
    %cst_32 = arith.constant 0.00999999977 : f32
    %52 = vector.broadcast %cst_32 : f32 to vector<4x256xf32>
    %53 = arith.mulf %52, %51 : vector<4x256xf32>
    %54 = arith.maximumf %51, %53 : vector<4x256xf32>
    %c17_i32 = arith.constant 17 : i32
    %55 = tpu.dynamic_rotate %54 by %c17_i32 dim 1 : vector<4x256xf32>, i32 -> vector<4x256xf32>
    %c0_33 = arith.constant 0 : index
    %c0_34 = arith.constant 0 : index
    %56 = vector.load %arg1[%c0_33, %c0_34] : memref<9x256xf32, #tpu.memory_space<vmem>>, vector<1x256xf32>
    %57 = vector.broadcast %56 : vector<1x256xf32> to vector<4x256xf32>
    %58 = arith.mulf %55, %57 : vector<4x256xf32>
    %c0_35 = arith.constant 0 : index
    %c0_36 = arith.constant 0 : index
    %59 = vector.load %arg7[%c0_35, %c0_36] : memref<40x256xf32, #tpu.memory_space<vmem>>, vector<4x256xf32>
    tpu.vector_store %arg7[%c0_35, %c0_36], %58 {strides = array<i32>} : memref<40x256xf32, #tpu.memory_space<vmem>>, vector<4x256xf32>,
    %c16_i32 = arith.constant 16 : i32
    %60 = tpu.dynamic_rotate %54 by %c16_i32 dim 1 : vector<4x256xf32>, i32 -> vector<4x256xf32>
    %c1_37 = arith.constant 1 : index
    %c0_38 = arith.constant 0 : index
    %61 = vector.load %arg1[%c1_37, %c0_38] : memref<9x256xf32, #tpu.memory_space<vmem>>, vector<1x256xf32>
    %62 = vector.broadcast %61 : vector<1x256xf32> to vector<4x256xf32>
    %63 = arith.mulf %60, %62 : vector<4x256xf32>
    %c4 = arith.constant 4 : index
    %c0_39 = arith.constant 0 : index
    %64 = vector.load %arg7[%c4, %c0_39] : memref<40x256xf32, #tpu.memory_space<vmem>>, vector<4x256xf32>
    tpu.vector_store %arg7[%c4, %c0_39], %63 {strides = array<i32>} : memref<40x256xf32, #tpu.memory_space<vmem>>, vector<4x256xf32>,
    %c15_i32 = arith.constant 15 : i32
    %65 = tpu.dynamic_rotate %54 by %c15_i32 dim 1 : vector<4x256xf32>, i32 -> vector<4x256xf32>
    %c2 = arith.constant 2 : index
    %c0_40 = arith.constant 0 : index
    %66 = vector.load %arg1[%c2, %c0_40] : memref<9x256xf32, #tpu.memory_space<vmem>>, vector<1x256xf32>
    %67 = vector.broadcast %66 : vector<1x256xf32> to vector<4x256xf32>
    %68 = arith.mulf %65, %67 : vector<4x256xf32>
    %c8 = arith.constant 8 : index
    %c0_41 = arith.constant 0 : index
    %69 = vector.load %arg7[%c8, %c0_41] : memref<40x256xf32, #tpu.memory_space<vmem>>, vector<4x256xf32>
    tpu.vector_store %arg7[%c8, %c0_41], %68 {strides = array<i32>} : memref<40x256xf32, #tpu.memory_space<vmem>>, vector<4x256xf32>,
    %c1_i32 = arith.constant 1 : i32
    %70 = tpu.dynamic_rotate %54 by %c1_i32 dim 1 : vector<4x256xf32>, i32 -> vector<4x256xf32>
    %c3 = arith.constant 3 : index
    %c0_42 = arith.constant 0 : index
    %71 = vector.load %arg1[%c3, %c0_42] : memref<9x256xf32, #tpu.memory_space<vmem>>, vector<1x256xf32>
    %72 = vector.broadcast %71 : vector<1x256xf32> to vector<4x256xf32>
    %73 = arith.mulf %70, %72 : vector<4x256xf32>
    %c12 = arith.constant 12 : index
    %c0_43 = arith.constant 0 : index
    %74 = vector.load %arg7[%c12, %c0_43] : memref<40x256xf32, #tpu.memory_space<vmem>>, vector<4x256xf32>
    tpu.vector_store %arg7[%c12, %c0_43], %73 {strides = array<i32>} : memref<40x256xf32, #tpu.memory_space<vmem>>, vector<4x256xf32>,
    %c16 = arith.constant 16 : index
    %c0_44 = arith.constant 0 : index
    %75 = vector.load %arg7[%c16, %c0_44] : memref<40x256xf32, #tpu.memory_space<vmem>>, vector<4x256xf32>
    tpu.vector_store %arg7[%c16, %c0_44], %54 {strides = array<i32>} : memref<40x256xf32, #tpu.memory_space<vmem>>, vector<4x256xf32>,
    %c255_i32 = arith.constant 255 : i32
    %76 = tpu.dynamic_rotate %54 by %c255_i32 dim 1 : vector<4x256xf32>, i32 -> vector<4x256xf32>
    %c5 = arith.constant 5 : index
    %c0_45 = arith.constant 0 : index
    %77 = vector.load %arg1[%c5, %c0_45] : memref<9x256xf32, #tpu.memory_space<vmem>>, vector<1x256xf32>
    %78 = vector.broadcast %77 : vector<1x256xf32> to vector<4x256xf32>
    %79 = arith.mulf %76, %78 : vector<4x256xf32>
    %c20 = arith.constant 20 : index
    %c0_46 = arith.constant 0 : index
    %80 = vector.load %arg7[%c20, %c0_46] : memref<40x256xf32, #tpu.memory_space<vmem>>, vector<4x256xf32>
    tpu.vector_store %arg7[%c20, %c0_46], %79 {strides = array<i32>} : memref<40x256xf32, #tpu.memory_space<vmem>>, vector<4x256xf32>,
    %c241_i32 = arith.constant 241 : i32
    %81 = tpu.dynamic_rotate %54 by %c241_i32 dim 1 : vector<4x256xf32>, i32 -> vector<4x256xf32>
    %c6 = arith.constant 6 : index
    %c0_47 = arith.constant 0 : index
    %82 = vector.load %arg1[%c6, %c0_47] : memref<9x256xf32, #tpu.memory_space<vmem>>, vector<1x256xf32>
    %83 = vector.broadcast %82 : vector<1x256xf32> to vector<4x256xf32>
    %84 = arith.mulf %81, %83 : vector<4x256xf32>
    %c24 = arith.constant 24 : index
    %c0_48 = arith.constant 0 : index
    %85 = vector.load %arg7[%c24, %c0_48] : memref<40x256xf32, #tpu.memory_space<vmem>>, vector<4x256xf32>
    tpu.vector_store %arg7[%c24, %c0_48], %84 {strides = array<i32>} : memref<40x256xf32, #tpu.memory_space<vmem>>, vector<4x256xf32>,
    %c240_i32 = arith.constant 240 : i32
    %86 = tpu.dynamic_rotate %54 by %c240_i32 dim 1 : vector<4x256xf32>, i32 -> vector<4x256xf32>
    %c7 = arith.constant 7 : index
    %c0_49 = arith.constant 0 : index
    %87 = vector.load %arg1[%c7, %c0_49] : memref<9x256xf32, #tpu.memory_space<vmem>>, vector<1x256xf32>
    %88 = vector.broadcast %87 : vector<1x256xf32> to vector<4x256xf32>
    %89 = arith.mulf %86, %88 : vector<4x256xf32>
    %c28 = arith.constant 28 : index
    %c0_50 = arith.constant 0 : index
    %90 = vector.load %arg7[%c28, %c0_50] : memref<40x256xf32, #tpu.memory_space<vmem>>, vector<4x256xf32>
    tpu.vector_store %arg7[%c28, %c0_50], %89 {strides = array<i32>} : memref<40x256xf32, #tpu.memory_space<vmem>>, vector<4x256xf32>,
    %c239_i32 = arith.constant 239 : i32
    %91 = tpu.dynamic_rotate %54 by %c239_i32 dim 1 : vector<4x256xf32>, i32 -> vector<4x256xf32>
    %c8_51 = arith.constant 8 : index
    %c0_52 = arith.constant 0 : index
    %92 = vector.load %arg1[%c8_51, %c0_52] : memref<9x256xf32, #tpu.memory_space<vmem>>, vector<1x256xf32>
    %93 = vector.broadcast %92 : vector<1x256xf32> to vector<4x256xf32>
    %94 = arith.mulf %91, %93 : vector<4x256xf32>
    %c32 = arith.constant 32 : index
    %c0_53 = arith.constant 0 : index
    %95 = vector.load %arg7[%c32, %c0_53] : memref<40x256xf32, #tpu.memory_space<vmem>>, vector<4x256xf32>
    tpu.vector_store %arg7[%c32, %c0_53], %94 {strides = array<i32>} : memref<40x256xf32, #tpu.memory_space<vmem>>, vector<4x256xf32>,
    %96 = vector.broadcast %34 : vector<4x1xf32> to vector<4x256xf32>
    %97 = arith.mulf %47, %96 : vector<4x256xf32>
    %98 = vector.broadcast %37 : vector<4x1xf32> to vector<4x256xf32>
    %99 = arith.addf %97, %98 : vector<4x256xf32>
    %c36 = arith.constant 36 : index
    %c0_54 = arith.constant 0 : index
    %100 = vector.load %arg7[%c36, %c0_54] : memref<40x256xf32, #tpu.memory_space<vmem>>, vector<4x256xf32>
    tpu.vector_store %arg7[%c36, %c0_54], %99 {strides = array<i32>} : memref<40x256xf32, #tpu.memory_space<vmem>>, vector<4x256xf32>,
    %c0_55 = arith.constant 0 : index
    %c0_56 = arith.constant 0 : index
    %101 = vector.load %arg7[%c0_55, %c0_56] : memref<40x256xf32, #tpu.memory_space<vmem>>, vector<40x256xf32>
    %cst_57 = arith.constant dense<0.000000e+00> : vector<8x256xf32>
    %102 = tpu.matmul %44, %101, %cst_57 {dimension_numbers = #tpu.dot_dimension_numbers<[1], [0], [0], [1], [0, 0, 1, 1], [], []>} : vector<8x40xf32>, vector<40x256xf32>, vector<8x256xf32> -> vector<8x256xf32>
    %103 = vector.broadcast %45 : vector<8x1xf32> to vector<8x256xf32>
    %104 = arith.addf %102, %103 : vector<8x256xf32>
    %c0_58 = arith.constant 0 : index
    %c0_59 = arith.constant 0 : index
    %c0_60 = arith.constant 0 : index
    %105 = vector.load %arg6[%c0_58, %c0_59, %c0_60] : memref<2x8x256xf32, #tpu.memory_space<vmem>>, vector<1x8x256xf32>
    %106 = vector.shape_cast %105 : vector<1x8x256xf32> to vector<8x256xf32>
    %107 = vector.shape_cast %104 : vector<8x256xf32> to vector<1x8x256xf32>
    tpu.vector_store %arg6[%c0_58, %c0_59, %c0_60], %107 {strides = array<i32>} : memref<2x8x256xf32, #tpu.memory_space<vmem>>, vector<1x8x256xf32>,
    %c1_61 = arith.constant 1 : index
    %c0_62 = arith.constant 0 : index
    %c0_63 = arith.constant 0 : index
    %108 = vector.load %arg0[%c1_61, %c0_62, %c0_63] : memref<2x4x256xf32, #tpu.memory_space<vmem>>, vector<1x4x256xf32>
    %109 = vector.shape_cast %108 : vector<1x4x256xf32> to vector<4x256xf32>
    %110 = vector.broadcast %39 : vector<4x1xf32> to vector<4x256xf32>
    %111 = arith.mulf %109, %110 : vector<4x256xf32>
    %112 = vector.broadcast %43 : vector<4x1xf32> to vector<4x256xf32>
    %113 = arith.addf %111, %112 : vector<4x256xf32>
    %cst_64 = arith.constant 0.00999999977 : f32
    %114 = vector.broadcast %cst_64 : f32 to vector<4x256xf32>
    %115 = arith.mulf %114, %113 : vector<4x256xf32>
    %116 = arith.maximumf %113, %115 : vector<4x256xf32>
    %c17_i32_65 = arith.constant 17 : i32
    %117 = tpu.dynamic_rotate %116 by %c17_i32_65 dim 1 : vector<4x256xf32>, i32 -> vector<4x256xf32>
    %c0_66 = arith.constant 0 : index
    %c0_67 = arith.constant 0 : index
    %118 = vector.load %arg1[%c0_66, %c0_67] : memref<9x256xf32, #tpu.memory_space<vmem>>, vector<1x256xf32>
    %119 = vector.broadcast %118 : vector<1x256xf32> to vector<4x256xf32>
    %120 = arith.mulf %117, %119 : vector<4x256xf32>
    %c0_68 = arith.constant 0 : index
    %c0_69 = arith.constant 0 : index
    %121 = vector.load %arg7[%c0_68, %c0_69] : memref<40x256xf32, #tpu.memory_space<vmem>>, vector<4x256xf32>
    tpu.vector_store %arg7[%c0_68, %c0_69], %120 {strides = array<i32>} : memref<40x256xf32, #tpu.memory_space<vmem>>, vector<4x256xf32>,
    %c16_i32_70 = arith.constant 16 : i32
    %122 = tpu.dynamic_rotate %116 by %c16_i32_70 dim 1 : vector<4x256xf32>, i32 -> vector<4x256xf32>
    %c1_71 = arith.constant 1 : index
    %c0_72 = arith.constant 0 : index
    %123 = vector.load %arg1[%c1_71, %c0_72] : memref<9x256xf32, #tpu.memory_space<vmem>>, vector<1x256xf32>
    %124 = vector.broadcast %123 : vector<1x256xf32> to vector<4x256xf32>
    %125 = arith.mulf %122, %124 : vector<4x256xf32>
    %c4_73 = arith.constant 4 : index
    %c0_74 = arith.constant 0 : index
    %126 = vector.load %arg7[%c4_73, %c0_74] : memref<40x256xf32, #tpu.memory_space<vmem>>, vector<4x256xf32>
    tpu.vector_store %arg7[%c4_73, %c0_74], %125 {strides = array<i32>} : memref<40x256xf32, #tpu.memory_space<vmem>>, vector<4x256xf32>,
    %c15_i32_75 = arith.constant 15 : i32
    %127 = tpu.dynamic_rotate %116 by %c15_i32_75 dim 1 : vector<4x256xf32>, i32 -> vector<4x256xf32>
    %c2_76 = arith.constant 2 : index
    %c0_77 = arith.constant 0 : index
    %128 = vector.load %arg1[%c2_76, %c0_77] : memref<9x256xf32, #tpu.memory_space<vmem>>, vector<1x256xf32>
    %129 = vector.broadcast %128 : vector<1x256xf32> to vector<4x256xf32>
    %130 = arith.mulf %127, %129 : vector<4x256xf32>
    %c8_78 = arith.constant 8 : index
    %c0_79 = arith.constant 0 : index
    %131 = vector.load %arg7[%c8_78, %c0_79] : memref<40x256xf32, #tpu.memory_space<vmem>>, vector<4x256xf32>
    tpu.vector_store %arg7[%c8_78, %c0_79], %130 {strides = array<i32>} : memref<40x256xf32, #tpu.memory_space<vmem>>, vector<4x256xf32>,
    %c1_i32_80 = arith.constant 1 : i32
    %132 = tpu.dynamic_rotate %116 by %c1_i32_80 dim 1 : vector<4x256xf32>, i32 -> vector<4x256xf32>
    %c3_81 = arith.constant 3 : index
    %c0_82 = arith.constant 0 : index
    %133 = vector.load %arg1[%c3_81, %c0_82] : memref<9x256xf32, #tpu.memory_space<vmem>>, vector<1x256xf32>
    %134 = vector.broadcast %133 : vector<1x256xf32> to vector<4x256xf32>
    %135 = arith.mulf %132, %134 : vector<4x256xf32>
    %c12_83 = arith.constant 12 : index
    %c0_84 = arith.constant 0 : index
    %136 = vector.load %arg7[%c12_83, %c0_84] : memref<40x256xf32, #tpu.memory_space<vmem>>, vector<4x256xf32>
    tpu.vector_store %arg7[%c12_83, %c0_84], %135 {strides = array<i32>} : memref<40x256xf32, #tpu.memory_space<vmem>>, vector<4x256xf32>,
    %c16_85 = arith.constant 16 : index
    %c0_86 = arith.constant 0 : index
    %137 = vector.load %arg7[%c16_85, %c0_86] : memref<40x256xf32, #tpu.memory_space<vmem>>, vector<4x256xf32>
    tpu.vector_store %arg7[%c16_85, %c0_86], %116 {strides = array<i32>} : memref<40x256xf32, #tpu.memory_space<vmem>>, vector<4x256xf32>,
    %c255_i32_87 = arith.constant 255 : i32
    %138 = tpu.dynamic_rotate %116 by %c255_i32_87 dim 1 : vector<4x256xf32>, i32 -> vector<4x256xf32>
    %c5_88 = arith.constant 5 : index
    %c0_89 = arith.constant 0 : index
    %139 = vector.load %arg1[%c5_88, %c0_89] : memref<9x256xf32, #tpu.memory_space<vmem>>, vector<1x256xf32>
    %140 = vector.broadcast %139 : vector<1x256xf32> to vector<4x256xf32>
    %141 = arith.mulf %138, %140 : vector<4x256xf32>
    %c20_90 = arith.constant 20 : index
    %c0_91 = arith.constant 0 : index
    %142 = vector.load %arg7[%c20_90, %c0_91] : memref<40x256xf32, #tpu.memory_space<vmem>>, vector<4x256xf32>
    tpu.vector_store %arg7[%c20_90, %c0_91], %141 {strides = array<i32>} : memref<40x256xf32, #tpu.memory_space<vmem>>, vector<4x256xf32>,
    %c241_i32_92 = arith.constant 241 : i32
    %143 = tpu.dynamic_rotate %116 by %c241_i32_92 dim 1 : vector<4x256xf32>, i32 -> vector<4x256xf32>
    %c6_93 = arith.constant 6 : index
    %c0_94 = arith.constant 0 : index
    %144 = vector.load %arg1[%c6_93, %c0_94] : memref<9x256xf32, #tpu.memory_space<vmem>>, vector<1x256xf32>
    %145 = vector.broadcast %144 : vector<1x256xf32> to vector<4x256xf32>
    %146 = arith.mulf %143, %145 : vector<4x256xf32>
    %c24_95 = arith.constant 24 : index
    %c0_96 = arith.constant 0 : index
    %147 = vector.load %arg7[%c24_95, %c0_96] : memref<40x256xf32, #tpu.memory_space<vmem>>, vector<4x256xf32>
    tpu.vector_store %arg7[%c24_95, %c0_96], %146 {strides = array<i32>} : memref<40x256xf32, #tpu.memory_space<vmem>>, vector<4x256xf32>,
    %c240_i32_97 = arith.constant 240 : i32
    %148 = tpu.dynamic_rotate %116 by %c240_i32_97 dim 1 : vector<4x256xf32>, i32 -> vector<4x256xf32>
    %c7_98 = arith.constant 7 : index
    %c0_99 = arith.constant 0 : index
    %149 = vector.load %arg1[%c7_98, %c0_99] : memref<9x256xf32, #tpu.memory_space<vmem>>, vector<1x256xf32>
    %150 = vector.broadcast %149 : vector<1x256xf32> to vector<4x256xf32>
    %151 = arith.mulf %148, %150 : vector<4x256xf32>
    %c28_100 = arith.constant 28 : index
    %c0_101 = arith.constant 0 : index
    %152 = vector.load %arg7[%c28_100, %c0_101] : memref<40x256xf32, #tpu.memory_space<vmem>>, vector<4x256xf32>
    tpu.vector_store %arg7[%c28_100, %c0_101], %151 {strides = array<i32>} : memref<40x256xf32, #tpu.memory_space<vmem>>, vector<4x256xf32>,
    %c239_i32_102 = arith.constant 239 : i32
    %153 = tpu.dynamic_rotate %116 by %c239_i32_102 dim 1 : vector<4x256xf32>, i32 -> vector<4x256xf32>
    %c8_103 = arith.constant 8 : index
    %c0_104 = arith.constant 0 : index
    %154 = vector.load %arg1[%c8_103, %c0_104] : memref<9x256xf32, #tpu.memory_space<vmem>>, vector<1x256xf32>
    %155 = vector.broadcast %154 : vector<1x256xf32> to vector<4x256xf32>
    %156 = arith.mulf %153, %155 : vector<4x256xf32>
    %c32_105 = arith.constant 32 : index
    %c0_106 = arith.constant 0 : index
    %157 = vector.load %arg7[%c32_105, %c0_106] : memref<40x256xf32, #tpu.memory_space<vmem>>, vector<4x256xf32>
    tpu.vector_store %arg7[%c32_105, %c0_106], %156 {strides = array<i32>} : memref<40x256xf32, #tpu.memory_space<vmem>>, vector<4x256xf32>,
    %158 = vector.broadcast %34 : vector<4x1xf32> to vector<4x256xf32>
    %159 = arith.mulf %109, %158 : vector<4x256xf32>
    %160 = vector.broadcast %37 : vector<4x1xf32> to vector<4x256xf32>
    %161 = arith.addf %159, %160 : vector<4x256xf32>
    %c36_107 = arith.constant 36 : index
    %c0_108 = arith.constant 0 : index
    %162 = vector.load %arg7[%c36_107, %c0_108] : memref<40x256xf32, #tpu.memory_space<vmem>>, vector<4x256xf32>
    tpu.vector_store %arg7[%c36_107, %c0_108], %161 {strides = array<i32>} : memref<40x256xf32, #tpu.memory_space<vmem>>, vector<4x256xf32>,
    %c0_109 = arith.constant 0 : index
    %c0_110 = arith.constant 0 : index
    %163 = vector.load %arg7[%c0_109, %c0_110] : memref<40x256xf32, #tpu.memory_space<vmem>>, vector<40x256xf32>
    %cst_111 = arith.constant dense<0.000000e+00> : vector<8x256xf32>
    %164 = tpu.matmul %44, %163, %cst_111 {dimension_numbers = #tpu.dot_dimension_numbers<[1], [0], [0], [1], [0, 0, 1, 1], [], []>} : vector<8x40xf32>, vector<40x256xf32>, vector<8x256xf32> -> vector<8x256xf32>
    %165 = vector.broadcast %45 : vector<8x1xf32> to vector<8x256xf32>
    %166 = arith.addf %164, %165 : vector<8x256xf32>
    %c1_112 = arith.constant 1 : index
    %c0_113 = arith.constant 0 : index
    %c0_114 = arith.constant 0 : index
    %167 = vector.load %arg6[%c1_112, %c0_113, %c0_114] : memref<2x8x256xf32, #tpu.memory_space<vmem>>, vector<1x8x256xf32>
    %168 = vector.shape_cast %167 : vector<1x8x256xf32> to vector<8x256xf32>
    %169 = vector.shape_cast %166 : vector<8x256xf32> to vector<1x8x256xf32>
    tpu.vector_store %arg6[%c1_112, %c0_113, %c0_114], %169 {strides = array<i32>} : memref<2x8x256xf32, #tpu.memory_space<vmem>>, vector<1x8x256xf32>,
    return
  }
}

</mosaic_0001>

<llo_original>
// kernel: resup_block_forward.1
$region0: #{resup_block_forward.1}
  #allocation0 [shape = 'u32[]', space=smem, size = 0x4, offset = 0x4, fixed_abs, tag = 'smem constant byte address 0x4 - core index']
  #allocation1 [shape = 'u32[72,128]{1,0:T(1,128)}', space=vmem, size = 0x9000, scoped, tag = 'internal scratch']
  #allocation2 [shape = 'f32[40,256]{1,0:T(8,128)}', space=vmem, size = 0xa000, scoped, tag = 'scratch operand']
  %s0 = inlined_call_operand.vmem [shape: f32[2,4,256], index: 0, kind: input, shape index: {}]
  %s1 = inlined_call_operand.vmem [shape: f32[9,256], index: 1, kind: input, shape index: {}]
  %s2 = inlined_call_operand.vmem [shape: f32[8,40], index: 2, kind: input, shape index: {}]
  %s3 = inlined_call_operand.vmem [shape: f32[8,1], index: 3, kind: input, shape index: {}]
  %s4 = inlined_call_operand.vmem [shape: f32[4,1], index: 4, kind: input, shape index: {}]
  %s5 = inlined_call_operand.vmem [shape: f32[4,1], index: 5, kind: input, shape index: {}]
  %s6 = inlined_call_operand.vmem [shape: f32[2,8,256], index: 6, kind: output, shape index: {}]
  %s7 = sld [smem:[#allocation0]]
  $region34: #{resup_block_forward.1} parent=0
    _
  %s9 = ssub.s32 1, %s7
  %s10 = scalar_select 0, %s9, %s7
  // Predicated region
  $region2: #{resup_block_forward.1} parent=0 // pred_check
    _
  $region3: #{resup_block_forward.1} parent=0 // pred_check_branch
    %12 = sbr.rel (0) target = $region5
  $region4: #{resup_block_forward.1} parent=0 // pred_region
    _
  $region5: #{resup_block_forward.1} parent=0 // pred_fallthru
    _
  // Predicated region
  $region6: #{resup_block_forward.1} parent=0 // pred_check
    _
  $region7: #{resup_block_forward.1} parent=0 // pred_check_branch
    %14 = sbr.rel (0) target = $region9
  $region8: #{resup_block_forward.1} parent=0 // pred_region
    _
  $region9: #{resup_block_forward.1} parent=0 // pred_fallthru
    _
  // Predicated region
  $region10: #{resup_block_forward.1} parent=0 // pred_check
    _
  $region11: #{resup_block_forward.1} parent=0 // pred_check_branch
    %16 = sbr.rel (0) target = $region13
  $region12: #{resup_block_forward.1} parent=0 // pred_region
    _
  $region13: #{resup_block_forward.1} parent=0 // pred_fallthru
    _
  // Predicated region
  $region14: #{resup_block_forward.1} parent=0 // pred_check
    _
  $region15: #{resup_block_forward.1} parent=0 // pred_check_branch
    %18 = sbr.rel (0) target = $region17
  $region16: #{resup_block_forward.1} parent=0 // pred_region
    _
  $region17: #{resup_block_forward.1} parent=0 // pred_fallthru
    _
  // Predicated region
  $region18: #{resup_block_forward.1} parent=0 // pred_check
    _
  $region19: #{resup_block_forward.1} parent=0 // pred_check_branch
    %20 = sbr.rel (0) target = $region21
  $region20: #{resup_block_forward.1} parent=0 // pred_region
    _
  $region21: #{resup_block_forward.1} parent=0 // pred_fallthru
    _
  // Predicated region
  $region22: #{resup_block_forward.1} parent=0 // pred_check
    _
  $region23: #{resup_block_forward.1} parent=0 // pred_check_branch
    %22 = sbr.rel (0) target = $region25
  $region24: #{resup_block_forward.1} parent=0 // pred_region
    _
  $region25: #{resup_block_forward.1} parent=0 // pred_fallthru
    _
  %v23 = vld [vmem:[%s0] sm:$0xff]
  %25 = vst [vmem:[#allocation1] ss:$2 sm:$0xff] %v23
  %v26 = vld.sshfl [vmem:[#allocation1] sm:$0xff pattern:$0x75316420]
  %v27 = vld.sshfl [vmem:[#allocation1 + $0x8] sm:$0xff pattern:$0x75316420]
  %vm30 = vcmask 1043456
  %v31 = vsel %vm30, %v26, 0.0
  %v32 = vsel %vm30, %v27, 0.0
  %v33 = vadd.f32 %v31, %v32
  %34 = vadd.xlane.f32.xlu0 %v33
  %v35 = vpop.xlane.xlu0 %34
  %v36 = vadd.f32 %v35, 0.0
  %s37 = scalar_lea.vmem %s0, 8
  %v38 = vld [vmem:[%s37] sm:$0xff]
  %40 = vst [vmem:[#allocation1] ss:$2 sm:$0xff] %v38
  %v41 = vld.sshfl [vmem:[#allocation1] sm:$0xff pattern:$0x75316420]
  %v42 = vld.sshfl [vmem:[#allocation1 + $0x8] sm:$0xff pattern:$0x75316420]
  %v45 = vsel %vm30, %v41, 0.0
  %v46 = vsel %vm30, %v42, 0.0
  %v47 = vadd.f32 %v45, %v46
  %48 = vadd.xlane.f32.xlu0 %v47
  %v49 = vpop.xlane.xlu0 %48
  %v50 = vadd.f32 %v36, %v49
  %v51 = vmul.f32 %v50, 0.001953125
  %v54 = vunpack.c.l.s4 839922192
  %v55 = vunpack.c.0.s8 %v54
  %v56 = vperm.slane %v51, %v55
  %v58 = vsub.f32 %v23, %v56
  %v59 = vmul.f32 %v58, %v58
  %61 = vst [vmem:[#allocation1] ss:$2 sm:$0xff] %v59
  %v62 = vld.sshfl [vmem:[#allocation1] sm:$0xff pattern:$0x75316420]
  %v63 = vld.sshfl [vmem:[#allocation1 + $0x8] sm:$0xff pattern:$0x75316420]
  %v66 = vsel %vm30, %v62, 0.0
  %v67 = vsel %vm30, %v63, 0.0
  %v68 = vadd.f32 %v66, %v67
  %69 = vadd.xlane.f32.xlu0 %v68
  %v70 = vpop.xlane.xlu0 %69
  %v71 = vadd.f32 %v70, 0.0
  %v72 = vsub.f32 %v38, %v56
  %v73 = vmul.f32 %v72, %v72
  %75 = vst [vmem:[#allocation1] ss:$2 sm:$0xff] %v73
  %v76 = vld.sshfl [vmem:[#allocation1] sm:$0xff pattern:$0x75316420]
  %v77 = vld.sshfl [vmem:[#allocation1 + $0x8] sm:$0xff pattern:$0x75316420]
  %v80 = vsel %vm30, %v76, 0.0
  %v81 = vsel %vm30, %v77, 0.0
  %v82 = vadd.f32 %v80, %v81
  %83 = vadd.xlane.f32.xlu0 %v82
  %v84 = vpop.xlane.xlu0 %83
  %v85 = vadd.f32 %v71, %v84
  %v86 = vmul.f32 %v85, 0.001953125
  %v87 = vadd.f32 %v86, 1e-05
  %v88 = vrsqrt.pop %v87
  %v89 = vmul.f32 %v88, %v87
  %v90 = vmul.f32 %v89, %v88
  %v91 = vmul.f32 0.5, %v90
  %v92 = vsub.f32 1.5, %v91
  %v93 = vmul.f32 %v88, %v92
  %vm94 = vweird.f32 %v87
  %vm95 = vweird.f32 %v88
  %vm96 = vmor %vm94, %vm95
  %v97 = vsel %vm96, %v88, %v93
  %v98 = vsub.f32 0.0, %v51
  %v99 = vmul.f32 %v98, %v97
  %v100 = vld [vmem:[%s4] sm:$0xf]
  %v101 = vmul.f32 %v100, %v97
  %v102 = vld [vmem:[%s5] sm:$0xf]
  %v103 = vmul.f32 %v100, %v99
  %v104 = vadd.f32 %v102, %v103
  %v105 = vld [vmem:[%s2] sm:$0xff]
  %v106 = vld [vmem:[%s3] sm:$0xff]
  %108 = vset.pattern.permute.xlu0 0
  %109 = vperm.xlu0 %108, %v101
  %v110 = vpop.permute.xlu0 %109
  %v112 = vunpack.c.l.s4 839922192
  %v113 = vunpack.c.0.s8 %v112
  %v114 = vperm.slane %v110, %v113
  %v116 = vmul.f32 %v23, %v114
  %118 = vset.pattern.permute.xlu0 0
  %119 = vperm.xlu0 %118, %v104
  %v120 = vpop.permute.xlu0 %119
  %v122 = vunpack.c.l.s4 839922192
  %v123 = vunpack.c.0.s8 %v122
  %v124 = vperm.slane %v120, %v123
  %v126 = vadd.f32 %v116, %v124
  %v127 = vmul.f32 %v126, 0.01
  %v128 = vmax.f32 %v126, %v127
  %130 = vst [vmem:[#allocation1] ss:$2 sm:$0xff] %v128
  %v131 = vld.sshfl [vmem:[#allocation1] sm:$0xff pattern:$0x75316420]
  %v132 = vld.sshfl [vmem:[#allocation1 + $0x8] sm:$0xff pattern:$0x75316420]
  %135 = vrot.lane.b32.xlu0 %v131, 17
  %v136 = vpop.permute.xlu0 %135
  %137 = vrot.lane.b32.xlu0 %v132, 17
  %v138 = vpop.permute.xlu0 %137
  %v139 = vlaneseq
  %v140 = vand.u32 %v139, 127
  %vm141 = vcmp.lt.s32.totalorder %v140, 17
  %v142 = vsel %vm141, %v136, %v138
  %v143 = vsel %vm141, %v138, %v136
  %v144 = vld [vmem:[%s1] ss:$8 sm:$0x3]
  %v146 = vperm.slane %v144, 0
  %v147 = vperm.slane %v144, 1
  %v150 = vmul.f32 %v143, %v146
  %v151 = vmul.f32 %v142, %v147
  %152 = vst [vmem:[#allocation2] sm:$0xf] %v150
  %153 = vst [vmem:[#allocation2 + $0x8] sm:$0xf] %v151
  %154 = vst [vmem:[#allocation1] ss:$2 sm:$0xff] %v128
  %v155 = vld.sshfl [vmem:[#allocation1] sm:$0xff pattern:$0x75316420]
  %v156 = vld.sshfl [vmem:[#allocation1 + $0x8] sm:$0xff pattern:$0x75316420]
  %159 = vrot.lane.b32.xlu0 %v155, 16
  %v160 = vpop.permute.xlu0 %159
  %161 = vrot.lane.b32.xlu0 %v156, 16
  %v162 = vpop.permute.xlu0 %161
  %vm163 = vcmp.lt.s32.totalorder %v140, 16
  %v164 = vsel %vm163, %v160, %v162
  %v165 = vsel %vm163, %v162, %v160
  %s166 = scalar_lea.vmem %s1, 1
  %v167 = vld [vmem:[%s166] ss:$8 sm:$0x3]
  %v169 = vperm.slane %v167, 0
  %v170 = vperm.slane %v167, 1
  %v173 = vmul.f32 %v165, %v169
  %v174 = vmul.f32 %v164, %v170
  %v177 = vrot.slane %v173, 4
  %v178 = vrot.slane %v174, 4
  %181 = vst [vmem:[#allocation2] sm:$0xf0] %v177
  %182 = vst [vmem:[#allocation2 + $0x8] sm:$0xf0] %v178
  %183 = vst [vmem:[#allocation1] ss:$2 sm:$0xff] %v128
  %v184 = vld.sshfl [vmem:[#allocation1] sm:$0xff pattern:$0x75316420]
  %v185 = vld.sshfl [vmem:[#allocation1 + $0x8] sm:$0xff pattern:$0x75316420]
  %188 = vrot.lane.b32.xlu0 %v184, 15
  %v189 = vpop.permute.xlu0 %188
  %190 = vrot.lane.b32.xlu0 %v185, 15
  %v191 = vpop.permute.xlu0 %190
  %vm192 = vcmp.lt.s32.totalorder %v140, 15
  %v193 = vsel %vm192, %v189, %v191
  %v194 = vsel %vm192, %v191, %v189
  %s195 = scalar_lea.vmem %s1, 2
  %v196 = vld [vmem:[%s195] ss:$8 sm:$0x3]
  %v198 = vperm.slane %v196, 0
  %v199 = vperm.slane %v196, 1
  %v202 = vmul.f32 %v194, %v198
  %v203 = vmul.f32 %v193, %v199
  %204 = vst [vmem:[#allocation2 + $0x10] sm:$0xf] %v202
  %205 = vst [vmem:[#allocation2 + $0x18] sm:$0xf] %v203
  %206 = vst [vmem:[#allocation1] ss:$2 sm:$0xff] %v128
  %v207 = vld.sshfl [vmem:[#allocation1] sm:$0xff pattern:$0x75316420]
  %v208 = vld.sshfl [vmem:[#allocation1 + $0x8] sm:$0xff pattern:$0x75316420]
  %211 = vrot.lane.b32.xlu0 %v207, 1
  %v212 = vpop.permute.xlu0 %211
  %213 = vrot.lane.b32.xlu0 %v208, 1
  %v214 = vpop.permute.xlu0 %213
  %vm215 = vcmp.lt.s32.totalorder %v140, 1
  %v216 = vsel %vm215, %v212, %v214
  %v217 = vsel %vm215, %v214, %v212
  %s218 = scalar_lea.vmem %s1, 3
  %v219 = vld [vmem:[%s218] ss:$8 sm:$0x3]
  %v221 = vperm.slane %v219, 0
  %v222 = vperm.slane %v219, 1
  %v225 = vmul.f32 %v217, %v221
  %v226 = vmul.f32 %v216, %v222
  %v229 = vrot.slane %v225, 4
  %v230 = vrot.slane %v226, 4
  %233 = vst [vmem:[#allocation2 + $0x10] sm:$0xf0] %v229
  %234 = vst [vmem:[#allocation2 + $0x18] sm:$0xf0] %v230
  %235 = vst [vmem:[#allocation1] ss:$2 sm:$0xff] %v128
  %v236 = vld.sshfl [vmem:[#allocation1] sm:$0xff pattern:$0x75316420]
  %v237 = vld.sshfl [vmem:[#allocation1 + $0x8] sm:$0xff pattern:$0x75316420]
  %240 = vst [vmem:[#allocation2 + $0x20] sm:$0xf] %v236
  %241 = vst [vmem:[#allocation2 + $0x28] sm:$0xf] %v237
  %242 = vst [vmem:[#allocation1] ss:$2 sm:$0xff] %v128
  %v243 = vld.sshfl [vmem:[#allocation1] sm:$0xff pattern:$0x75316420]
  %v244 = vld.sshfl [vmem:[#allocation1 + $0x8] sm:$0xff pattern:$0x75316420]
  %247 = vrot.lane.b32.xlu0 %v243, 127
  %v248 = vpop.permute.xlu0 %247
  %249 = vrot.lane.b32.xlu0 %v244, 127
  %v250 = vpop.permute.xlu0 %249
  %vm251 = vcmp.lt.s32.totalorder %v140, 127
  %v252 = vsel %vm251, %v248, %v250
  %v253 = vsel %vm251, %v250, %v248
  %s254 = scalar_lea.vmem %s1, 5
  %v255 = vld [vmem:[%s254] ss:$8 sm:$0x3]
  %v257 = vperm.slane %v255, 0
  %v258 = vperm.slane %v255, 1
  %v261 = vmul.f32 %v252, %v257
  %v262 = vmul.f32 %v253, %v258
  %v265 = vrot.slane %v261, 4
  %v266 = vrot.slane %v262, 4
  %269 = vst [vmem:[#allocation2 + $0x20] sm:$0xf0] %v265
  %270 = vst [vmem:[#allocation2 + $0x28] sm:$0xf0] %v266
  %271 = vst [vmem:[#allocation1] ss:$2 sm:$0xff] %v128
  %v272 = vld.sshfl [vmem:[#allocation1] sm:$0xff pattern:$0x75316420]
  %v273 = vld.sshfl [vmem:[#allocation1 + $0x8] sm:$0xff pattern:$0x75316420]
  %276 = vrot.lane.b32.xlu0 %v272, 113
  %v277 = vpop.permute.xlu0 %276
  %278 = vrot.lane.b32.xlu0 %v273, 113
  %v279 = vpop.permute.xlu0 %278
  %vm280 = vcmp.lt.s32.totalorder %v140, 113
  %v281 = vsel %vm280, %v277, %v279
  %v282 = vsel %vm280, %v279, %v277
  %s283 = scalar_lea.vmem %s1, 6
  %v284 = vld [vmem:[%s283] ss:$8 sm:$0x3]
  %v286 = vperm.slane %v284, 0
  %v287 = vperm.slane %v284, 1
  %v290 = vmul.f32 %v281, %v286
  %v291 = vmul.f32 %v282, %v287
  %292 = vst [vmem:[#allocation2 + $0x30] sm:$0xf] %v290
  %293 = vst [vmem:[#allocation2 + $0x38] sm:$0xf] %v291
  %294 = vst [vmem:[#allocation1] ss:$2 sm:$0xff] %v128
  %v295 = vld.sshfl [vmem:[#allocation1] sm:$0xff pattern:$0x75316420]
  %v296 = vld.sshfl [vmem:[#allocation1 + $0x8] sm:$0xff pattern:$0x75316420]
  %299 = vrot.lane.b32.xlu0 %v295, 112
  %v300 = vpop.permute.xlu0 %299
  %301 = vrot.lane.b32.xlu0 %v296, 112
  %v302 = vpop.permute.xlu0 %301
  %vm303 = vcmp.lt.s32.totalorder %v140, 112
  %v304 = vsel %vm303, %v300, %v302
  %v305 = vsel %vm303, %v302, %v300
  %s306 = scalar_lea.vmem %s1, 7
  %v307 = vld [vmem:[%s306] ss:$8 sm:$0x3]
  %v309 = vperm.slane %v307, 0
  %v310 = vperm.slane %v307, 1
  %v313 = vmul.f32 %v304, %v309
  %v314 = vmul.f32 %v305, %v310
  %v317 = vrot.slane %v313, 4
  %v318 = vrot.slane %v314, 4
  %321 = vst [vmem:[#allocation2 + $0x30] sm:$0xf0] %v317
  %322 = vst [vmem:[#allocation2 + $0x38] sm:$0xf0] %v318
  %323 = vst [vmem:[#allocation1] ss:$2 sm:$0xff] %v128
  %v324 = vld.sshfl [vmem:[#allocation1] sm:$0xff pattern:$0x75316420]
  %v325 = vld.sshfl [vmem:[#allocation1 + $0x8] sm:$0xff pattern:$0x75316420]
  %328 = vrot.lane.b32.xlu0 %v324, 111
  %v329 = vpop.permute.xlu0 %328
  %330 = vrot.lane.b32.xlu0 %v325, 111
  %v331 = vpop.permute.xlu0 %330
  %vm332 = vcmp.lt.s32.totalorder %v140, 111
  %v333 = vsel %vm332, %v329, %v331
  %v334 = vsel %vm332, %v331, %v329
  %s335 = scalar_lea.vmem %s1, 16
  %v336 = vld [vmem:[%s335] ss:$8 sm:$0x3]
  %v338 = vperm.slane %v336, 0
  %v339 = vperm.slane %v336, 1
  %v342 = vmul.f32 %v333, %v338
  %v343 = vmul.f32 %v334, %v339
  %344 = vst [vmem:[#allocation2 + $0x40] sm:$0xf] %v342
  %345 = vst [vmem:[#allocation2 + $0x48] sm:$0xf] %v343
  %v348 = vunpack.c.l.s4 839922192
  %v349 = vunpack.c.0.s8 %v348
  %v350 = vperm.slane %v97, %v349
  %v352 = vmul.f32 %v23, %v350
  %v355 = vunpack.c.l.s4 839922192
  %v356 = vunpack.c.0.s8 %v355
  %v357 = vperm.slane %v99, %v356
  %v359 = vadd.f32 %v352, %v357
  %s361 = scalar_lea.vmem [#allocation1], 1
  %362 = vst [vmem:[%s361] ss:$2 sm:$0xff] %v359
  %v363 = vld.sshfl [vmem:[#allocation1] sm:$0xff pattern:$0x75316420]
  %v364 = vld.sshfl [vmem:[#allocation1 + $0x8] sm:$0xff pattern:$0x75316420]
  %367 = vst [vmem:[#allocation2 + $0x40] sm:$0xf0] %v363
  %368 = vst [vmem:[#allocation2 + $0x48] sm:$0xf0] %v364
  %v369 = vld [vmem:[#allocation2] sm:$0xff]
  %v370 = vld [vmem:[#allocation2 + $0x8] sm:$0xff]
  %v371 = vld [vmem:[#allocation2 + $0x10] sm:$0xff]
  %v372 = vld [vmem:[#allocation2 + $0x18] sm:$0xff]
  %v373 = vld [vmem:[#allocation2 + $0x20] sm:$0xff]
  %v374 = vld [vmem:[#allocation2 + $0x28] sm:$0xff]
  %v375 = vld [vmem:[#allocation2 + $0x30] sm:$0xff]
  %v376 = vld [vmem:[#allocation2 + $0x38] sm:$0xff]
  %v377 = vld [vmem:[#allocation2 + $0x40] sm:$0xff]
  %v378 = vld [vmem:[#allocation2 + $0x48] sm:$0xff]
  %380 = vset.pattern.permute.xlu0 0
  %381 = vperm.xlu0 %380, %v106
  %v382 = vpop.permute.xlu0 %381
  %vm384 = vcmask 326656
  %v386 = vsel %vm384, %v105, 0
  %388 = vmatpush.msra.mxu0 0.0
  %389 = vmatpush.msra.mxu0 0.0
  %390 = vmatpush.msra.mxu0 0.0
  %391 = vmatpush.msra.mxu0 0.0
  %392 = vmatpush.msra.mxu0 0.0
  %393 = vmatpush.msra.mxu0 0.0
  %394 = vmatpush.msra.mxu0 0.0
  %395 = vmatpush.msra.mxu0 0.0
  %396 = vmatpush.msra.mxu0 0.0
  %397 = vmatpush.msra.mxu0 0.0
  %398 = vmatpush.msra.mxu0 0.0
  %399 = vmatpush.msra.mxu0 %v377
  %400 = vmatpush.msra.mxu0 %v375
  %401 = vmatpush.msra.mxu0 %v373
  %402 = vmatpush.msra.mxu0 %v371
  %403 = vmatpush.msra.mxu0 %v369
  %404 = vmatmul.f32.gmra.mxu0 %v386
  %v405 = vpop.f32.mrf.mxu0
  %v406 = vadd.f32 %v382, %v405
  %407 = vdwg.mxu0
  %408 = vmatpush.msra.mxu0 0.0
  %409 = vmatpush.msra.mxu0 0.0
  %410 = vmatpush.msra.mxu0 0.0
  %411 = vmatpush.msra.mxu0 0.0
  %412 = vmatpush.msra.mxu0 0.0
  %413 = vmatpush.msra.mxu0 0.0
  %414 = vmatpush.msra.mxu0 0.0
  %415 = vmatpush.msra.mxu0 0.0
  %416 = vmatpush.msra.mxu0 0.0
  %417 = vmatpush.msra.mxu0 0.0
  %418 = vmatpush.msra.mxu0 0.0
  %419 = vmatpush.msra.mxu0 %v378
  %420 = vmatpush.msra.mxu0 %v376
  %421 = vmatpush.msra.mxu0 %v374
  %422 = vmatpush.msra.mxu0 %v372
  %423 = vmatpush.msra.mxu0 %v370
  %424 = vmatmul.f32.gmra.mxu0 %v386
  %v425 = vpop.f32.mrf.mxu0
  %v426 = vadd.f32 %v382, %v425
  %427 = vdwg.mxu0
  %428 = vst [vmem:[%s6] sm:$0xff] %v406
  %429 = vst [vmem:[%s6 + $0x8] sm:$0xff] %v426
  %v430 = vld [vmem:[%s37] sm:$0xff]
  %v431 = vmul.f32 %v430, %v114
  %v432 = vadd.f32 %v431, %v124
  %v433 = vmul.f32 %v432, 0.01
  %v434 = vmax.f32 %v432, %v433
  %436 = vst [vmem:[#allocation1] ss:$2 sm:$0xff] %v434
  %v437 = vld.sshfl [vmem:[#allocation1] sm:$0xff pattern:$0x75316420]
  %v438 = vld.sshfl [vmem:[#allocation1 + $0x8] sm:$0xff pattern:$0x75316420]
  %441 = vrot.lane.b32.xlu0 %v437, 17
  %v442 = vpop.permute.xlu0 %441
  %443 = vrot.lane.b32.xlu0 %v438, 17
  %v444 = vpop.permute.xlu0 %443
  %v445 = vsel %vm141, %v442, %v444
  %v446 = vsel %vm141, %v444, %v442
  %v447 = vld [vmem:[%s1] ss:$8 sm:$0x3]
  %v449 = vperm.slane %v447, 0
  %v450 = vperm.slane %v447, 1
  %v453 = vmul.f32 %v446, %v449
  %v454 = vmul.f32 %v445, %v450
  %455 = vst [vmem:[#allocation2] sm:$0xf] %v453
  %456 = vst [vmem:[#allocation2 + $0x8] sm:$0xf] %v454
  %457 = vst [vmem:[#allocation1] ss:$2 sm:$0xff] %v434
  %v458 = vld.sshfl [vmem:[#allocation1] sm:$0xff pattern:$0x75316420]
  %v459 = vld.sshfl [vmem:[#allocation1 + $0x8] sm:$0xff pattern:$0x75316420]
  %462 = vrot.lane.b32.xlu0 %v458, 16
  %v463 = vpop.permute.xlu0 %462
  %464 = vrot.lane.b32.xlu0 %v459, 16
  %v465 = vpop.permute.xlu0 %464
  %v466 = vsel %vm163, %v463, %v465
  %v467 = vsel %vm163, %v465, %v463
  %v468 = vld [vmem:[%s166] ss:$8 sm:$0x3]
  %v470 = vperm.slane %v468, 0
  %v471 = vperm.slane %v468, 1
  %v474 = vmul.f32 %v467, %v470
  %v475 = vmul.f32 %v466, %v471
  %v478 = vrot.slane %v474, 4
  %v479 = vrot.slane %v475, 4
  %482 = vst [vmem:[#allocation2] sm:$0xf0] %v478
  %483 = vst [vmem:[#allocation2 + $0x8] sm:$0xf0] %v479
  %484 = vst [vmem:[#allocation1] ss:$2 sm:$0xff] %v434
  %v485 = vld.sshfl [vmem:[#allocation1] sm:$0xff pattern:$0x75316420]
  %v486 = vld.sshfl [vmem:[#allocation1 + $0x8] sm:$0xff pattern:$0x75316420]
  %489 = vrot.lane.b32.xlu0 %v485, 15
  %v490 = vpop.permute.xlu0 %489
  %491 = vrot.lane.b32.xlu0 %v486, 15
  %v492 = vpop.permute.xlu0 %491
  %v493 = vsel %vm192, %v490, %v492
  %v494 = vsel %vm192, %v492, %v490
  %v495 = vld [vmem:[%s195] ss:$8 sm:$0x3]
  %v497 = vperm.slane %v495, 0
  %v498 = vperm.slane %v495, 1
  %v501 = vmul.f32 %v494, %v497
  %v502 = vmul.f32 %v493, %v498
  %503 = vst [vmem:[#allocation2 + $0x10] sm:$0xf] %v501
  %504 = vst [vmem:[#allocation2 + $0x18] sm:$0xf] %v502
  %505 = vst [vmem:[#allocation1] ss:$2 sm:$0xff] %v434
  %v506 = vld.sshfl [vmem:[#allocation1] sm:$0xff pattern:$0x75316420]
  %v507 = vld.sshfl [vmem:[#allocation1 + $0x8] sm:$0xff pattern:$0x75316420]
  %510 = vrot.lane.b32.xlu0 %v506, 1
  %v511 = vpop.permute.xlu0 %510
  %512 = vrot.lane.b32.xlu0 %v507, 1
  %v513 = vpop.permute.xlu0 %512
  %v514 = vsel %vm215, %v511, %v513
  %v515 = vsel %vm215, %v513, %v511
  %v516 = vld [vmem:[%s218] ss:$8 sm:$0x3]
  %v518 = vperm.slane %v516, 0
  %v519 = vperm.slane %v516, 1
  %v522 = vmul.f32 %v515, %v518
  %v523 = vmul.f32 %v514, %v519
  %v526 = vrot.slane %v522, 4
  %v527 = vrot.slane %v523, 4
  %530 = vst [vmem:[#allocation2 + $0x10] sm:$0xf0] %v526
  %531 = vst [vmem:[#allocation2 + $0x18] sm:$0xf0] %v527
  %532 = vst [vmem:[#allocation1] ss:$2 sm:$0xff] %v434
  %v533 = vld.sshfl [vmem:[#allocation1] sm:$0xff pattern:$0x75316420]
  %v534 = vld.sshfl [vmem:[#allocation1 + $0x8] sm:$0xff pattern:$0x75316420]
  %537 = vst [vmem:[#allocation2 + $0x20] sm:$0xf] %v533
  %538 = vst [vmem:[#allocation2 + $0x28] sm:$0xf] %v534
  %539 = vst [vmem:[#allocation1] ss:$2 sm:$0xff] %v434
  %v540 = vld.sshfl [vmem:[#allocation1] sm:$0xff pattern:$0x75316420]
  %v541 = vld.sshfl [vmem:[#allocation1 + $0x8] sm:$0xff pattern:$0x75316420]
  %544 = vrot.lane.b32.xlu0 %v540, 127
  %v545 = vpop.permute.xlu0 %544
  %546 = vrot.lane.b32.xlu0 %v541, 127
  %v547 = vpop.permute.xlu0 %546
  %v548 = vsel %vm251, %v545, %v547
  %v549 = vsel %vm251, %v547, %v545
  %v550 = vld [vmem:[%s254] ss:$8 sm:$0x3]
  %v552 = vperm.slane %v550, 0
  %v553 = vperm.slane %v550, 1
  %v556 = vmul.f32 %v548, %v552
  %v557 = vmul.f32 %v549, %v553
  %v560 = vrot.slane %v556, 4
  %v561 = vrot.slane %v557, 4
  %564 = vst [vmem:[#allocation2 + $0x20] sm:$0xf0] %v560
  %565 = vst [vmem:[#allocation2 + $0x28] sm:$0xf0] %v561
  %566 = vst [vmem:[#allocation1] ss:$2 sm:$0xff] %v434
  %v567 = vld.sshfl [vmem:[#allocation1] sm:$0xff pattern:$0x75316420]
  %v568 = vld.sshfl [vmem:[#allocation1 + $0x8] sm:$0xff pattern:$0x75316420]
  %571 = vrot.lane.b32.xlu0 %v567, 113
  %v572 = vpop.permute.xlu0 %571
  %573 = vrot.lane.b32.xlu0 %v568, 113
  %v574 = vpop.permute.xlu0 %573
  %v575 = vsel %vm280, %v572, %v574
  %v576 = vsel %vm280, %v574, %v572
  %v577 = vld [vmem:[%s283] ss:$8 sm:$0x3]
  %v579 = vperm.slane %v577, 0
  %v580 = vperm.slane %v577, 1
  %v583 = vmul.f32 %v575, %v579
  %v584 = vmul.f32 %v576, %v580
  %585 = vst [vmem:[#allocation2 + $0x30] sm:$0xf] %v583
  %586 = vst [vmem:[#allocation2 + $0x38] sm:$0xf] %v584
  %587 = vst [vmem:[#allocation1] ss:$2 sm:$0xff] %v434
  %v588 = vld.sshfl [vmem:[#allocation1] sm:$0xff pattern:$0x75316420]
  %v589 = vld.sshfl [vmem:[#allocation1 + $0x8] sm:$0xff pattern:$0x75316420]
  %592 = vrot.lane.b32.xlu0 %v588, 112
  %v593 = vpop.permute.xlu0 %592
  %594 = vrot.lane.b32.xlu0 %v589, 112
  %v595 = vpop.permute.xlu0 %594
  %v596 = vsel %vm303, %v593, %v595
  %v597 = vsel %vm303, %v595, %v593
  %v598 = vld [vmem:[%s306] ss:$8 sm:$0x3]
  %v600 = vperm.slane %v598, 0
  %v601 = vperm.slane %v598, 1
  %v604 = vmul.f32 %v596, %v600
  %v605 = vmul.f32 %v597, %v601
  %v608 = vrot.slane %v604, 4
  %v609 = vrot.slane %v605, 4
  %612 = vst [vmem:[#allocation2 + $0x30] sm:$0xf0] %v608
  %613 = vst [vmem:[#allocation2 + $0x38] sm:$0xf0] %v609
  %614 = vst [vmem:[#allocation1] ss:$2 sm:$0xff] %v434
  %v615 = vld.sshfl [vmem:[#allocation1] sm:$0xff pattern:$0x75316420]
  %v616 = vld.sshfl [vmem:[#allocation1 + $0x8] sm:$0xff pattern:$0x75316420]
  %619 = vrot.lane.b32.xlu0 %v615, 111
  %v620 = vpop.permute.xlu0 %619
  %621 = vrot.lane.b32.xlu0 %v616, 111
  %v622 = vpop.permute.xlu0 %621
  %v623 = vsel %vm332, %v620, %v622
  %v624 = vsel %vm332, %v622, %v620
  %v625 = vld [vmem:[%s335] ss:$8 sm:$0x3]
  %v627 = vperm.slane %v625, 0
  %v628 = vperm.slane %v625, 1
  %v631 = vmul.f32 %v623, %v627
  %v632 = vmul.f32 %v624, %v628
  %633 = vst [vmem:[#allocation2 + $0x40] sm:$0xf] %v631
  %634 = vst [vmem:[#allocation2 + $0x48] sm:$0xf] %v632
  %v635 = vmul.f32 %v430, %v350
  %v636 = vadd.f32 %v635, %v357
  %s638 = scalar_lea.vmem [#allocation1], 1
  %639 = vst [vmem:[%s638] ss:$2 sm:$0xff] %v636
  %v640 = vld.sshfl [vmem:[#allocation1] sm:$0xff pattern:$0x75316420]
  %v641 = vld.sshfl [vmem:[#allocation1 + $0x8] sm:$0xff pattern:$0x75316420]
  %644 = vst [vmem:[#allocation2 + $0x40] sm:$0xf0] %v640
  %645 = vst [vmem:[#allocation2 + $0x48] sm:$0xf0] %v641
  %v646 = vld [vmem:[#allocation2] sm:$0xff]
  %v647 = vld [vmem:[#allocation2 + $0x8] sm:$0xff]
  %v648 = vld [vmem:[#allocation2 + $0x10] sm:$0xff]
  %v649 = vld [vmem:[#allocation2 + $0x18] sm:$0xff]
  %v650 = vld [vmem:[#allocation2 + $0x20] sm:$0xff]
  %v651 = vld [vmem:[#allocation2 + $0x28] sm:$0xff]
  %v652 = vld [vmem:[#allocation2 + $0x30] sm:$0xff]
  %v653 = vld [vmem:[#allocation2 + $0x38] sm:$0xff]
  %v654 = vld [vmem:[#allocation2 + $0x40] sm:$0xff]
  %v655 = vld [vmem:[#allocation2 + $0x48] sm:$0xff]
  %656 = vmatpush.msra.mxu0 0.0
  %657 = vmatpush.msra.mxu0 0.0
  %658 = vmatpush.msra.mxu0 0.0
  %659 = vmatpush.msra.mxu0 0.0
  %660 = vmatpush.msra.mxu0 0.0
  %661 = vmatpush.msra.mxu0 0.0
  %662 = vmatpush.msra.mxu0 0.0
  %663 = vmatpush.msra.mxu0 0.0
  %664 = vmatpush.msra.mxu0 0.0
  %665 = vmatpush.msra.mxu0 0.0
  %666 = vmatpush.msra.mxu0 0.0
  %667 = vmatpush.msra.mxu0 %v654
  %668 = vmatpush.msra.mxu0 %v652
  %669 = vmatpush.msra.mxu0 %v650
  %670 = vmatpush.msra.mxu0 %v648
  %671 = vmatpush.msra.mxu0 %v646
  %672 = vmatmul.f32.gmra.mxu0 %v386
  %v673 = vpop.f32.mrf.mxu0
  %v674 = vadd.f32 %v382, %v673
  %675 = vdwg.mxu0
  %676 = vmatpush.msra.mxu0 0.0
  %677 = vmatpush.msra.mxu0 0.0
  %678 = vmatpush.msra.mxu0 0.0
  %679 = vmatpush.msra.mxu0 0.0
  %680 = vmatpush.msra.mxu0 0.0
  %681 = vmatpush.msra.mxu0 0.0
  %682 = vmatpush.msra.mxu0 0.0
  %683 = vmatpush.msra.mxu0 0.0
  %684 = vmatpush.msra.mxu0 0.0
  %685 = vmatpush.msra.mxu0 0.0
  %686 = vmatpush.msra.mxu0 0.0
  %687 = vmatpush.msra.mxu0 %v655
  %688 = vmatpush.msra.mxu0 %v653
  %689 = vmatpush.msra.mxu0 %v651
  %690 = vmatpush.msra.mxu0 %v649
  %691 = vmatpush.msra.mxu0 %v647
  %692 = vmatmul.f32.gmra.mxu0 %v386
  %v693 = vpop.f32.mrf.mxu0
  %v694 = vadd.f32 %v382, %v693
  %695 = vdwg.mxu0
  %s696 = scalar_lea.vmem %s6, 16
  %697 = vst [vmem:[%s696] sm:$0xff] %v674
  %698 = vst [vmem:[%s696 + $0x8] sm:$0xff] %v694
  // Predicated region
  $region26: #{resup_block_forward.1} parent=0 // pred_check
    _
  $region27: #{resup_block_forward.1} parent=0 // pred_check_branch
    %700 = sbr.rel (0) target = $region29
  $region28: #{resup_block_forward.1} parent=0 // pred_region
    _
  $region29: #{resup_block_forward.1} parent=0 // pred_fallthru
    _
  // Predicated region
  $region30: #{resup_block_forward.1} parent=0 // pred_check
    _
  $region31: #{resup_block_forward.1} parent=0 // pred_check_branch
    %702 = sbr.rel (0) target = $region33
  $region32: #{resup_block_forward.1} parent=0 // pred_region
    _
  $region33: #{resup_block_forward.1} parent=0 // pred_fallthru
    _

</llo_original>
